<compile_context>
chip_gen: v7x
topology: tpu7x:2x2x1
jax: 0.10.0
libtpu: 0.0.40
codegen_flags: <defaults>
</compile_context>

<pallas_src>
import functools

import jax
import jax.numpy as jnp
from jax.experimental import pallas as pl
from jax.experimental.pallas import tpu as pltpu

_LANES = 128
_SUBLANES = 8
_MIB = 1024 * 1024


def _round_up(x, m):
    return ((x + m - 1) // m) * m


def _chip_config():
    """Returns (per_input_per_buffer_bytes, num_shards) for this TPU generation."""
    vmem_cap = 128 * _MIB
    try:
        info = pltpu.get_tpu_info()
        vmem_cap = int(getattr(info, "vmem_capacity_bytes", vmem_cap))
    except Exception:
        pass
    if vmem_cap <= 96 * _MIB:
        # v7x-class: 64 MiB VMEM per TensorCore, 2 TensorCores per chip.
        # 4 MiB/input/buffer -> 16 MiB of double-buffered inputs (ample headroom).
        return 4 * _MIB, 2
    # v5e/v6e-class: 128 MiB VMEM, single TensorCore.
    # 8 MiB/input/buffer -> 32 MiB of double-buffered inputs.
    return 8 * _MIB, 1


def _mse_kernel(pred_ref, true_ref, out_ref, *, tile_rows, steps_per_shard,
                valid_rows, mask_needed):
    s = pl.program_id(0)   # shard axis ("parallel": split across TCs on v7x)
    i = pl.program_id(1)   # reduction axis within the shard ("arbitrary")

    @pl.when(i == 0)
    def _():
        out_ref[...] = jnp.zeros_like(out_ref)

    # Widen in-VMEM (inputs stay narrow in HBM for sub-f32 dtypes).
    diff = pred_ref[...].astype(jnp.float32) - true_ref[...].astype(jnp.float32)
    sq = diff * diff

    def accumulate(vals):
        # Fold sublane chunks with pure VPU adds into the resident (8, 128)
        # output block; the expensive cross-lane reduction happens once in the
        # wrapper.
        out_ref[...] += jnp.sum(
            vals.reshape(tile_rows // _SUBLANES, _SUBLANES, _LANES),
            axis=0).reshape(1, _SUBLANES, _LANES)

    if mask_needed:
        # Only blocks that can overhang valid_rows (the last partial block and
        # clamped duplicate blocks of the last shard) pay the mask; interior
        # blocks take the unmasked fast path. Logical block position is used so
        # clamped duplicates contribute exactly zero. Keep this a select (not a
        # multiply) so garbage NaN/Inf beyond the array can never poison the sum.
        block_start = (s * steps_per_shard + i) * tile_rows
        overhangs = block_start + tile_rows > valid_rows

        @pl.when(overhangs)
        def _():
            row_ids = block_start + jax.lax.broadcasted_iota(
                jnp.int32, (tile_rows, _LANES), 0)
            accumulate(jnp.where(row_ids < valid_rows, sq, 0.0))

        @pl.when(jnp.logical_not(overhangs))
        def _():
            accumulate(sq)
    else:
        accumulate(sq)


def mse_loss(y_pred, y_true, *, tile_rows=None, num_shards=None):
    """Pallas TPU implementation of torch.mean((y_pred - y_true) ** 2)."""
    assert y_pred.shape == y_true.shape, "shapes must match"
    n = int(y_pred.size)
    if n == 0:  # torch.mean of an empty tensor is NaN
        return jnp.full((), jnp.nan, jnp.float32)

    per_buf_bytes, default_shards = _chip_config()
    itemsize = jnp.dtype(y_pred.dtype).itemsize

    # Dtype-aware tile: rows per block sized so each pipeline buffer is
    # ~per_buf_bytes regardless of element width.
    if tile_rows is None:
        tile_rows = per_buf_bytes // (_LANES * itemsize)
    tile_rows = max(_SUBLANES, _round_up(int(tile_rows), _SUBLANES))
    if num_shards is None:
        num_shards = default_shards

    p = jnp.ravel(y_pred)
    t = jnp.ravel(y_true)

    rows = n // _LANES
    rem = n - rows * _LANES

    # <=127-element tail handled in plain JAX (O(127) work); no full-array pad.
    tail_sum = jnp.zeros((), jnp.float32)
    if rem:
        td = (p[rows * _LANES:].astype(jnp.float32)
              - t[rows * _LANES:].astype(jnp.float32))
        tail_sum = jnp.sum(td * td)

    if rows == 0:
        return tail_sum / jnp.float32(n)

    # (rows, 128) lane-major layout; copy-free when n % 128 == 0.
    p2 = p[: rows * _LANES].reshape(rows, _LANES)
    t2 = t[: rows * _LANES].reshape(rows, _LANES)

    tr = min(tile_rows, _round_up(rows, _SUBLANES))
    total_blocks = pl.cdiv(rows, tr)

    # Shard the row stream across TensorCores (2x on v7x-class); on single-TC
    # chips this collapses to 1 (no duplicate-block DMA, no extra finalize).
    n_shards = max(1, min(int(num_shards), total_blocks))
    steps = pl.cdiv(total_blocks, n_shards)
    last_block = total_blocks - 1

    # Masking is only compiled in if some block can actually overhang the data
    # (partial last block or clamped overshoot block of the last shard).
    mask_needed = (rows % tr != 0) or (n_shards * steps != total_blocks)

    def in_map(s, i):
        # Clamp so every DMA stays in-bounds; clamped (duplicate) blocks are
        # fully masked out inside the kernel.
        return (jnp.minimum(s * steps + i, last_block), 0)

    kernel = functools.partial(
        _mse_kernel, tile_rows=tr, steps_per_shard=steps,
        valid_rows=rows, mask_needed=mask_needed)

    # Scoped-VMEM budget scales with the tile: 2 inputs x 2 pipeline buffers
    # plus headroom for the output block and Mosaic internal scratch.
    input_buf_bytes = 4 * tr * _LANES * itemsize
    vmem_limit = max(24 * _MIB, input_buf_bytes + 8 * _MIB)

    partials = pl.pallas_call(
        kernel,
        out_shape=jax.ShapeDtypeStruct((n_shards, _SUBLANES, _LANES), jnp.float32),
        grid_spec=pltpu.PrefetchScalarGridSpec(
            num_scalar_prefetch=0,
            grid=(n_shards, steps),
            in_specs=[
                pl.BlockSpec((tr, _LANES), in_map),
                pl.BlockSpec((tr, _LANES), in_map),
            ],
            out_specs=pl.BlockSpec((1, _SUBLANES, _LANES), lambda s, i: (s, 0, 0)),
        ),
        compiler_params=pltpu.CompilerParams(
            dimension_semantics=("parallel", "arbitrary"),
            vmem_limit_bytes=int(vmem_limit),
        ),
        cost_estimate=pl.CostEstimate(
            flops=3 * n,
            transcendentals=0,
            bytes_accessed=2 * rows * _LANES * itemsize
            + n_shards * _SUBLANES * _LANES * 4,
        ),
    )(p2, t2)

    # Tiny final reduction (<= 2*8*128 f32) + mean over the true element count.
    return (jnp.sum(partials) + tail_sum) / jnp.float32(n)


if __name__ == "__main__":
    key = jax.random.PRNGKey(0)
    k1, k2, k3, k4, k5, k6 = jax.random.split(key, 6)

    # Small shape consistent with a regression loss over (batch, channels, H, W).
    y_pred = jax.random.normal(k1, (2, 4, 16, 16), dtype=jnp.float32)
    y_true = jax.random.normal(k2, (2, 4, 16, 16), dtype=jnp.float32)
    loss = mse_loss(y_pred, y_true)
    jax.block_until_ready(loss)
    ref = jnp.mean((y_pred - y_true) ** 2)
    assert jnp.allclose(loss, ref, rtol=1e-5, atol=1e-6), (loss, ref)

    # Non-128-multiple element count: aligned prefix through the kernel plus
    # the plain-JAX tail fix-up (and an overhanging single block -> row mask).
    a = jax.random.normal(k3, (3, 5, 7, 11), dtype=jnp.float32)
    b = jax.random.normal(k4, (3, 5, 7, 11), dtype=jnp.float32)
    l2 = mse_loss(a, b)
    r2 = jnp.mean((a - b) ** 2)
    assert jnp.allclose(l2, r2, rtol=1e-5, atol=1e-6), (l2, r2)

    # Larger input: default big-tile path, plus forced small-tile paths that
    # exercise the two-shard axis, the clamped duplicate block and the masked
    # final partial block.
    c = jax.random.normal(k5, (768, 1024), dtype=jnp.float32)
    d = jax.random.normal(k6, (768, 1024), dtype=jnp.float32)
    r3 = jnp.mean((c - d) ** 2)
    l3 = mse_loss(c, d)                                # big-tile default path
    l4 = mse_loss(c, d, tile_rows=2048, num_shards=2)  # 3 blocks, 2 shards (dup block)
    l5 = mse_loss(c, d, tile_rows=640, num_shards=2)   # masked final partial block
    for lx in (l3, l4, l5):
        assert jnp.allclose(lx, r3, rtol=1e-5, atol=1e-6), (lx, r3)

    jax.block_until_ready((l2, l3, l4, l5))
    print("KERNEL_OK")
</pallas_src>

<mosaic_0001>
module attributes {stable_mosaic.version = 11 : i64} {
  func.func @_mse_kernel(%arg0: i32, %arg1: i32, %arg2: memref<16x128xf32, #tpu.memory_space<vmem>>, %arg3: memref<16x128xf32, #tpu.memory_space<vmem>>, %arg4: memref<1x8x128xf32, #tpu.memory_space<vmem>>) attributes {dimension_semantics = [#tpu.dimension_semantics<parallel>, #tpu.dimension_semantics<arbitrary>], iteration_bounds = array<i64: 1, 1>, scalar_prefetch = 0 : i64, scratch_operands = 0 : i64, tpu.core_type = #tpu.core_type<tc>, window_params = [{transform_indices = @transform_0, window_bounds = array<i64: 16, 128>}, {transform_indices = @transform_1, window_bounds = array<i64: 16, 128>}, {transform_indices = @transform_2, window_bounds = array<i64: 1, 8, 128>}]} {
    %c0_i32 = arith.constant 0 : i32
    %0 = arith.cmpi eq, %arg1, %c0_i32 : i32
    %1 = arith.extui %0 : i1 to i32
    %c0_i32_0 = arith.constant 0 : i32
    %2 = arith.cmpi ne, %1, %c0_i32_0 : i32
    scf.if %2 {
      %cst_10 = arith.constant 0.000000e+00 : f32
      %13 = vector.broadcast %cst_10 : f32 to vector<1x8x128xf32>
      %c0_11 = arith.constant 0 : index
      %c0_12 = arith.constant 0 : index
      %c0_13 = arith.constant 0 : index
      %14 = vector.load %arg4[%c0_11, %c0_12, %c0_13] : memref<1x8x128xf32, #tpu.memory_space<vmem>>, vector<1x8x128xf32>
      tpu.vector_store %arg4[%c0_11, %c0_12, %c0_13], %13 {strides = array<i32>} : memref<1x8x128xf32, #tpu.memory_space<vmem>>, vector<1x8x128xf32>,
    } else {
    }
    %c0 = arith.constant 0 : index
    %c0_1 = arith.constant 0 : index
    %3 = vector.load %arg2[%c0, %c0_1] : memref<16x128xf32, #tpu.memory_space<vmem>>, vector<16x128xf32>
    %c0_2 = arith.constant 0 : index
    %c0_3 = arith.constant 0 : index
    %4 = vector.load %arg3[%c0_2, %c0_3] : memref<16x128xf32, #tpu.memory_space<vmem>>, vector<16x128xf32>
    %5 = arith.subf %3, %4 : vector<16x128xf32>
    %6 = arith.mulf %5, %5 : vector<16x128xf32>
    %c0_4 = arith.constant 0 : index
    %c0_5 = arith.constant 0 : index
    %c0_6 = arith.constant 0 : index
    %7 = vector.load %arg4[%c0_4, %c0_5, %c0_6] : memref<1x8x128xf32, #tpu.memory_space<vmem>>, vector<1x8x128xf32>
    %8 = vector.shape_cast %6 : vector<16x128xf32> to vector<2x8x128xf32>
    %cst = arith.constant dense<0.000000e+00> : vector<8x128xf32>
    %9 = vector.multi_reduction <add>, %8, %cst [0] : vector<2x8x128xf32> to vector<8x128xf32>
    %10 = vector.shape_cast %9 : vector<8x128xf32> to vector<1x8x128xf32>
    %11 = arith.addf %7, %10 : vector<1x8x128xf32>
    %c0_7 = arith.constant 0 : index
    %c0_8 = arith.constant 0 : index
    %c0_9 = arith.constant 0 : index
    %12 = vector.load %arg4[%c0_7, %c0_8, %c0_9] : memref<1x8x128xf32, #tpu.memory_space<vmem>>, vector<1x8x128xf32>
    tpu.vector_store %arg4[%c0_7, %c0_8, %c0_9], %11 {strides = array<i32>} : memref<1x8x128xf32, #tpu.memory_space<vmem>>, vector<1x8x128xf32>,
    return
  }
  func.func @transform_0(%arg0: i32, %arg1: i32) -> (i32, i32) {
    %c1_i32 = arith.constant 1 : i32
    %0 = arith.muli %arg0, %c1_i32 : i32
    %1 = arith.addi %0, %arg1 : i32
    %c0_i32 = arith.constant 0 : i32
    %2 = arith.minsi %1, %c0_i32 : i32
    %c0_i32_0 = arith.constant 0 : i32
    %c0_i32_1 = arith.constant 0 : i32
    return %2, %c0_i32_0 : i32, i32
  }
  func.func @transform_1(%arg0: i32, %arg1: i32) -> (i32, i32) {
    %c1_i32 = arith.constant 1 : i32
    %0 = arith.muli %arg0, %c1_i32 : i32
    %1 = arith.addi %0, %arg1 : i32
    %c0_i32 = arith.constant 0 : i32
    %2 = arith.minsi %1, %c0_i32 : i32
    %c0_i32_0 = arith.constant 0 : i32
    %c0_i32_1 = arith.constant 0 : i32
    return %2, %c0_i32_0 : i32, i32
  }
  func.func @transform_2(%arg0: i32, %arg1: i32) -> (i32, i32, i32) {
    %c0_i32 = arith.constant 0 : i32
    %c0_i32_0 = arith.constant 0 : i32
    %c0_i32_1 = arith.constant 0 : i32
    return %arg0, %c0_i32, %c0_i32_0 : i32, i32, i32
  }
}

</mosaic_0001>

<llo_original>
// kernel: tpu_custom_call.1
$region0: #{tpu_custom_call.1}
  #allocation0 [shape = 'u32[]', space=smem, size = 0x4, offset = 0x4, fixed_abs, tag = 'smem constant byte address 0x4 - core index']
  #allocation1 [shape = 'u32[144,128]{1,0:T(1,128)}', space=vmem, size = 0x12000, scoped, tag = 'internal scratch']
  %s0 = inlined_call_operand.hbm [shape: f32[16,128], index: 0, kind: input, shape index: {}]
  %s1 = inlined_call_operand.hbm [shape: f32[16,128], index: 1, kind: input, shape index: {}]
  %s2 = inlined_call_operand.hbm [shape: f32[1,8,128], index: 2, kind: output, shape index: {}]
  %s3 = sld [smem:[#allocation0]]
  $region30: #{tpu_custom_call.1} parent=0
    _
  %s5 = ssub.s32 1, %s3
  %s6 = scalar_select 0, %s5, %s3
  $region1: #{tpu_custom_call.1} parent=0
    #allocation2 [shape = 'u8[8192]{0}', space=vmem, size = 0x2000, scoped, tag = 'input window, operand 0, single buffered']
    #allocation3 [shape = 's32[1]{0}', space=sflag, size = 0x4, scoped, tag = 'scoped memory for tpu_custom_call.1']
    #allocation4 [shape = 's32[1]{0}', space=sflag, size = 0x4, scoped, tag = 'scoped memory for tpu_custom_call.1']
    #allocation5 [shape = 'u8[8192]{0}', space=vmem, size = 0x2000, scoped, tag = 'input window, operand 1, single buffered']
    #allocation6 [shape = 's32[1]{0}', space=sflag, size = 0x4, scoped, tag = 'scoped memory for tpu_custom_call.1']
    #allocation7 [shape = 'u8[4096]{0}', space=vmem, size = 0x1000, scoped, tag = 'output window, operand 0, single buffered']
    %7 = vsyncpa [#allocation3], 0
    %8 = vsyncpa [#allocation6], 0
    %9 = vsyncpa [#allocation4], 0
    // Predicated region
    $region2: #{tpu_custom_call.1} parent=1 // pred_check
      _
    $region3: #{tpu_custom_call.1} parent=1 // pred_check_branch
      %11 = sbr.rel (0) target = $region5
    $region4: #{tpu_custom_call.1} parent=1 // pred_region
      %s12 = sadd.s32 0, 0
      %p13 = scmp.lt.s32.totalorder %s12, 0
      %s14 = scalar_select %p13, %s12, 0
      %s15 = smul.u32 2, %s14
      %s17 = ssub.s32 256, 256
      %18 = vsyncadd [#allocation3], %s17
      %s19 = smul.addr %s15, 128
      %s20 = scalar_lea.hbm %s0, %s19
      %s21 = sshll.u32 [#allocation2], 4
      %s22 = int_to_ptr.vmem [resolvable:$true] %s21
      %27 = dma.hbm_to_vmem [thread:$0]  %s20, 256, %s22, [#allocation3], 128, 128, 8
    $region5: #{tpu_custom_call.1} parent=1 // pred_fallthru
      _
    // Predicated region
    $region6: #{tpu_custom_call.1} parent=1 // pred_check
      _
    $region7: #{tpu_custom_call.1} parent=1 // pred_check_branch
      %29 = sbr.rel (0) target = $region9
    $region8: #{tpu_custom_call.1} parent=1 // pred_region
      %s30 = sadd.s32 0, 0
      %p31 = scmp.lt.s32.totalorder %s30, 0
      %s32 = scalar_select %p31, %s30, 0
      %s33 = smul.u32 2, %s32
      %s35 = ssub.s32 256, 256
      %36 = vsyncadd [#allocation6], %s35
      %s37 = smul.addr %s33, 128
      %s38 = scalar_lea.hbm %s1, %s37
      %s39 = sshll.u32 [#allocation5], 4
      %s40 = int_to_ptr.vmem [resolvable:$true] %s39
      %45 = dma.hbm_to_vmem [thread:$0]  %s38, 256, %s40, [#allocation6], 128, 128, 8
    $region9: #{tpu_custom_call.1} parent=1 // pred_fallthru
      _
    // Predicated region
    $region10: #{tpu_custom_call.1} parent=1 // pred_check
      _
    $region11: #{tpu_custom_call.1} parent=1 // pred_check_branch
      %47 = sbr.rel (0) target = $region13
    $region12: #{tpu_custom_call.1} parent=1 // pred_region
      %48 = dma.done [#allocation3], 256
    $region13: #{tpu_custom_call.1} parent=1 // pred_fallthru
      _
    // Predicated region
    $region14: #{tpu_custom_call.1} parent=1 // pred_check
      _
    $region15: #{tpu_custom_call.1} parent=1 // pred_check_branch
      %50 = sbr.rel (0) target = $region17
    $region16: #{tpu_custom_call.1} parent=1 // pred_region
      %51 = dma.done [#allocation6], 256
    $region17: #{tpu_custom_call.1} parent=1 // pred_fallthru
      _
    %s52 = sadd.s32 0, 0
    %p53 = scmp.lt.s32.totalorder %s52, 0
    %s54 = scalar_select %p53, %s52, 0
    %s55 = smul.u32 2, %s54
    %s56 = sadd.s32 0, 0
    %p57 = scmp.lt.s32.totalorder %s56, 0
    %s58 = scalar_select %p57, %s56, 0
    %s59 = smul.u32 2, %s58
    %p60 = scmp.eq.s32.totalorder 0, 0
    // Predicated region
    $region18: #{tpu_custom_call.1} parent=1 // pred_check
      %p61 = pneg %p60
    $region19: #{tpu_custom_call.1} parent=1 // pred_check_branch
      %63 = sbr.rel (%p61) target = $region21
    $region20: #{tpu_custom_call.1} parent=1 // pred_region
      %64 = vst [vmem:[#allocation7] sm:$0xff] 0.0
    $region21: #{tpu_custom_call.1} parent=1 // pred_fallthru
      _
    %v65 = vld [vmem:[#allocation2] sm:$0xff]
    %v66 = vld [vmem:[#allocation2 + $0x8] sm:$0xff]
    %v67 = vld [vmem:[#allocation5] sm:$0xff]
    %v68 = vld [vmem:[#allocation5 + $0x8] sm:$0xff]
    %v69 = vsub.f32 %v65, %v67
    %v70 = vsub.f32 %v66, %v68
    %v71 = vmul.f32 %v69, %v69
    %v72 = vmul.f32 %v70, %v70
    %v73 = vld [vmem:[#allocation7] sm:$0xff]
    %v74 = vadd.f32 %v71, %v72
    %v75 = vadd.f32 %v73, %v74
    %76 = vst [vmem:[#allocation7] sm:$0xff] %v75
    // Predicated region
    $region22: #{tpu_custom_call.1} parent=1 // pred_check
      _
    $region23: #{tpu_custom_call.1} parent=1 // pred_check_branch
      %78 = sbr.rel (0) target = $region25
    $region24: #{tpu_custom_call.1} parent=1 // pred_region
      %s80 = ssub.s32 128, 128
      %81 = vsyncadd [#allocation4], %s80
      %s83 = sshll.u32 [#allocation7], 4
      %s84 = int_to_ptr.vmem [resolvable:$true] %s83
      %86 = dma.vmem_to_hbm [thread:$0]  %s84, 128, %s2, [#allocation4]
    $region25: #{tpu_custom_call.1} parent=1 // pred_fallthru
      _
    // Predicated region
    $region26: #{tpu_custom_call.1} parent=1 // pred_check
      _
    $region27: #{tpu_custom_call.1} parent=1 // pred_check_branch
      %88 = sbr.rel (0) target = $region29
    $region28: #{tpu_custom_call.1} parent=1 // pred_region
      %89 = dma.done [#allocation4], 128
    $region29: #{tpu_custom_call.1} parent=1 // pred_fallthru
      _
    %90 = vsyncpa [#allocation3], 1
    %91 = vsyncpa [#allocation6], 1
    %92 = vsyncpa [#allocation4], 1

</llo_original>
